<compile_context>
chip_gen: v5e
topology: v5e:2x2
jax: 0.10.0
libtpu: 0.0.40
codegen_flags: <defaults>
</compile_context>

<pallas_src>
import jax
import jax.numpy as jnp
from jax.experimental import pallas as pl
from jax.experimental.pallas import tpu as pltpu


def add_ln_kernel(x_ref, z_ref, g_ref, b_ref, o_ref):
    # Elementwise add + row-wise mean/var reduction + affine, f32 accumulation.
    s = x_ref[...].astype(jnp.float32) + z_ref[...].astype(jnp.float32)
    mean = jnp.mean(s, axis=-1, keepdims=True)
    d = s - mean
    var = jnp.mean(d * d, axis=-1, keepdims=True)
    inv = jax.lax.rsqrt(var + 1e-5)
    # g_ref/b_ref are (1, hidden) f32; broadcast over rows.
    o_ref[...] = ((d * inv) * g_ref[...] + b_ref[...]).astype(o_ref.dtype)


def _is_v7x():
    try:
        return "v7" in jax.devices()[0].device_kind.lower()
    except Exception:
        return False


def _row_granularity(dtype):
    """Sublane packing granularity for the row dimension."""
    item = jnp.dtype(dtype).itemsize
    if item >= 4:
        return 8
    if item == 2:
        return 16
    return 32


def _pick_row_tile(rows, hidden, in_dtype, out_dtype, is_v7x):
    """Largest row tile that fits the double-buffered pipeline + f32 temps in VMEM,
    capped for DMA sweet-spot block sizes and enough grid steps for pipelining."""
    gran = max(_row_granularity(in_dtype), _row_granularity(out_dtype))
    in_item = jnp.dtype(in_dtype).itemsize
    out_item = jnp.dtype(out_dtype).itemsize

    # Double-buffered x/z inputs + out, plus ~2 row-wide f32 intermediates (s, d)
    # that spill into the same scoped VMEM.
    bytes_per_row = (2 * 2 * in_item + 2 * out_item) * hidden + 2 * 4 * hidden

    vmem_budget = (36 << 20) if is_v7x else (80 << 20)
    max_tile_vmem = max(gran, (vmem_budget // bytes_per_row) // gran * gran)

    # Bytes-based cap: ~6 MiB per buffered input block keeps DMAs large enough
    # to amortize the ~0.35 us per-step overhead without depending on hidden.
    target_block_bytes = 6 << 20
    max_tile_block = max(gran, (target_block_bytes // (hidden * in_item)) // gran * gran)

    tile = min(max_tile_vmem, max_tile_block)

    # Keep enough grid steps: >= ~8 on v7x (2 TCs, each with a >= 2-deep
    # pipeline), >= ~4 on single-TC chips — when the row count allows it.
    steps_target = 8 if is_v7x else 4
    if rows >= steps_target * gran:
        tile_for_steps = max(gran, (rows // steps_target) // gran * gran)
        tile = min(tile, tile_for_steps)
    else:
        tile = gran

    # Never larger than the (granularity-rounded) row count.
    rows_up = ((rows + gran - 1) // gran) * gran
    return max(gran, min(tile, rows_up))


def add_and_normalize(x, z, gamma, beta):
    """x, z: [batch, seq, hidden]; gamma, beta: [hidden]."""
    batch, seq, hidden = x.shape
    rows = batch * seq

    is_v7x = _is_v7x()
    row_tile = _pick_row_tile(rows, hidden, x.dtype, x.dtype, is_v7x)

    x2 = x.reshape(rows, hidden)
    z2 = z.reshape(rows, hidden)

    # One-time f32 cast outside the hot loop; constant index_map keeps these
    # blocks VMEM-resident with no per-step DMA.
    g2 = gamma.reshape(1, hidden).astype(jnp.float32)
    b2 = beta.reshape(1, hidden).astype(jnp.float32)

    grid = (pl.cdiv(rows, row_tile),)

    # Right-size the scoped-VMEM request: ~2x the actual pipeline footprint of
    # the chosen tile, capped under physical VMEM.
    in_item = jnp.dtype(x.dtype).itemsize
    out_item = jnp.dtype(x.dtype).itemsize
    footprint = (
        2 * row_tile * hidden * (2 * in_item + out_item)  # double-buffered x, z, out
        + 2 * row_tile * hidden * 4                        # f32 s/d intermediates
        + 2 * hidden * 4                                   # resident gamma/beta
    )
    phys_cap = (48 << 20) if is_v7x else (96 << 20)
    vmem_limit = int(min(phys_cap, max(8 << 20, 2 * footprint)))

    in_bytes = rows * hidden * in_item
    out_bytes = rows * hidden * out_item
    cost = pl.CostEstimate(
        flops=7 * rows * hidden,        # add, sub, sq, 2 reductions, scale, affine
        transcendentals=rows,           # one rsqrt per row
        bytes_accessed=2 * in_bytes + out_bytes,
    )

    out = pl.pallas_call(
        add_ln_kernel,
        out_shape=jax.ShapeDtypeStruct((rows, hidden), x.dtype),
        grid_spec=pltpu.PrefetchScalarGridSpec(
            num_scalar_prefetch=0,
            grid=grid,
            in_specs=[
                pl.BlockSpec((row_tile, hidden), lambda i: (i, 0)),
                pl.BlockSpec((row_tile, hidden), lambda i: (i, 0)),
                pl.BlockSpec((1, hidden), lambda i: (0, 0)),
                pl.BlockSpec((1, hidden), lambda i: (0, 0)),
            ],
            out_specs=pl.BlockSpec((row_tile, hidden), lambda i: (i, 0)),
        ),
        compiler_params=pltpu.CompilerParams(
            dimension_semantics=("parallel",),
            vmem_limit_bytes=vmem_limit,
        ),
        cost_estimate=cost,
    )(x2, z2, g2, b2)

    return out.reshape(batch, seq, hidden)


if __name__ == "__main__":
    batch, seq, hidden = 2, 8, 32

    key = jax.random.PRNGKey(0)
    kx, kz = jax.random.split(key)
    x = jax.random.normal(kx, (batch, seq, hidden), dtype=jnp.float32)
    z = jax.random.normal(kz, (batch, seq, hidden), dtype=jnp.float32)

    # nn.LayerNorm(shape) default init: weight = ones, bias = zeros (deterministic).
    gamma = jnp.ones((hidden,), dtype=jnp.float32)
    beta = jnp.zeros((hidden,), dtype=jnp.float32)

    out = add_and_normalize(x, z, gamma, beta)
    out = jax.block_until_ready(out)

    # Pure-JAX reference check.
    s = x + z
    mean = jnp.mean(s, axis=-1, keepdims=True)
    var = jnp.mean((s - mean) ** 2, axis=-1, keepdims=True)
    ref = (s - mean) * jax.lax.rsqrt(var + 1e-5) * gamma + beta
    assert jnp.allclose(out, ref, atol=1e-5, rtol=1e-5), "mismatch vs reference"

    print("KERNEL_OK")
</pallas_src>

<mosaic_0001>
module attributes {stable_mosaic.version = 11 : i64} {
  func.func @add_ln_kernel(%arg0: i32, %arg1: memref<8x32xf32, #tpu.memory_space<vmem>>, %arg2: memref<8x32xf32, #tpu.memory_space<vmem>>, %arg3: memref<1x32xf32, #tpu.memory_space<vmem>>, %arg4: memref<1x32xf32, #tpu.memory_space<vmem>>, %arg5: memref<8x32xf32, #tpu.memory_space<vmem>>) attributes {dimension_semantics = [#tpu.dimension_semantics<parallel>], iteration_bounds = array<i64: 2>, scalar_prefetch = 0 : i64, scratch_operands = 0 : i64, tpu.core_type = #tpu.core_type<tc>, window_params = [{transform_indices = @transform_0, window_bounds = array<i64: 8, 32>}, {transform_indices = @transform_1, window_bounds = array<i64: 8, 32>}, {pipeline_mode = #tpu.pipeline_mode<synchronous>, transform_indices = @transform_2, window_bounds = array<i64: 1, 32>}, {pipeline_mode = #tpu.pipeline_mode<synchronous>, transform_indices = @transform_3, window_bounds = array<i64: 1, 32>}, {transform_indices = @transform_4, window_bounds = array<i64: 8, 32>}]} {
    %c0 = arith.constant 0 : index
    %c0_0 = arith.constant 0 : index
    %0 = vector.load %arg1[%c0, %c0_0] : memref<8x32xf32, #tpu.memory_space<vmem>>, vector<8x32xf32>
    %c0_1 = arith.constant 0 : index
    %c0_2 = arith.constant 0 : index
    %1 = vector.load %arg2[%c0_1, %c0_2] : memref<8x32xf32, #tpu.memory_space<vmem>>, vector<8x32xf32>
    %2 = arith.addf %0, %1 : vector<8x32xf32>
    %cst = arith.constant dense<0.000000e+00> : vector<8xf32>
    %3 = vector.multi_reduction <add>, %2, %cst [1] : vector<8x32xf32> to vector<8xf32>
    %4 = vector.shape_cast %3 : vector<8xf32> to vector<8x1xf32>
    %cst_3 = arith.constant 3.200000e+01 : f32
    %5 = vector.broadcast %cst_3 : f32 to vector<8x1xf32>
    %6 = arith.divf %4, %5 : vector<8x1xf32>
    %7 = vector.broadcast %6 : vector<8x1xf32> to vector<8x32xf32>
    %8 = arith.subf %2, %7 : vector<8x32xf32>
    %9 = arith.mulf %8, %8 : vector<8x32xf32>
    %cst_4 = arith.constant dense<0.000000e+00> : vector<8xf32>
    %10 = vector.multi_reduction <add>, %9, %cst_4 [1] : vector<8x32xf32> to vector<8xf32>
    %11 = vector.shape_cast %10 : vector<8xf32> to vector<8x1xf32>
    %cst_5 = arith.constant 3.200000e+01 : f32
    %12 = vector.broadcast %cst_5 : f32 to vector<8x1xf32>
    %13 = arith.divf %11, %12 : vector<8x1xf32>
    %cst_6 = arith.constant 9.99999974E-6 : f32
    %14 = vector.broadcast %cst_6 : f32 to vector<8x1xf32>
    %15 = arith.addf %13, %14 : vector<8x1xf32>
    %16 = math.rsqrt %15 : vector<8x1xf32>
    %17 = vector.broadcast %16 : vector<8x1xf32> to vector<8x32xf32>
    %18 = arith.mulf %8, %17 : vector<8x32xf32>
    %c0_7 = arith.constant 0 : index
    %c0_8 = arith.constant 0 : index
    %19 = vector.load %arg3[%c0_7, %c0_8] : memref<1x32xf32, #tpu.memory_space<vmem>>, vector<1x32xf32>
    %20 = vector.broadcast %19 : vector<1x32xf32> to vector<8x32xf32>
    %21 = arith.mulf %18, %20 : vector<8x32xf32>
    %c0_9 = arith.constant 0 : index
    %c0_10 = arith.constant 0 : index
    %22 = vector.load %arg4[%c0_9, %c0_10] : memref<1x32xf32, #tpu.memory_space<vmem>>, vector<1x32xf32>
    %23 = vector.broadcast %22 : vector<1x32xf32> to vector<8x32xf32>
    %24 = arith.addf %21, %23 : vector<8x32xf32>
    %c0_11 = arith.constant 0 : index
    %c0_12 = arith.constant 0 : index
    %25 = vector.load %arg5[%c0_11, %c0_12] : memref<8x32xf32, #tpu.memory_space<vmem>>, vector<8x32xf32>
    tpu.vector_store %arg5[%c0_11, %c0_12], %24 {strides = array<i32>} : memref<8x32xf32, #tpu.memory_space<vmem>>, vector<8x32xf32>,
    return
  }
  func.func @transform_0(%arg0: i32) -> (i32, i32) {
    %c0_i32 = arith.constant 0 : i32
    %c0_i32_0 = arith.constant 0 : i32
    return %arg0, %c0_i32 : i32, i32
  }
  func.func @transform_1(%arg0: i32) -> (i32, i32) {
    %c0_i32 = arith.constant 0 : i32
    %c0_i32_0 = arith.constant 0 : i32
    return %arg0, %c0_i32 : i32, i32
  }
  func.func @transform_2(%arg0: i32) -> (i32, i32) {
    %c0_i32 = arith.constant 0 : i32
    %c0_i32_0 = arith.constant 0 : i32
    %c0_i32_1 = arith.constant 0 : i32
    return %c0_i32, %c0_i32_0 : i32, i32
  }
  func.func @transform_3(%arg0: i32) -> (i32, i32) {
    %c0_i32 = arith.constant 0 : i32
    %c0_i32_0 = arith.constant 0 : i32
    %c0_i32_1 = arith.constant 0 : i32
    return %c0_i32, %c0_i32_0 : i32, i32
  }
  func.func @transform_4(%arg0: i32) -> (i32, i32) {
    %c0_i32 = arith.constant 0 : i32
    %c0_i32_0 = arith.constant 0 : i32
    return %arg0, %c0_i32 : i32, i32
  }
}

</mosaic_0001>

<llo_original>
// kernel: tpu_custom_call.1
$region0: #{tpu_custom_call.1}
  #allocation0 [shape = 'u32[]', space=smem, size = 0x4, offset = 0x4, fixed_abs, tag = 'smem constant byte address 0x4 - core index']
  #allocation1 [shape = 'u32[72,128]{1,0:T(1,128)}', space=vmem, size = 0x9000, scoped, tag = 'internal scratch']
  %s0 = inlined_call_operand.hbm [shape: f32[16,32], index: 0, kind: input, shape index: {}]
  %s1 = inlined_call_operand.hbm [shape: f32[16,32], index: 1, kind: input, shape index: {}]
  %s2 = inlined_call_operand.vmem [shape: f32[1,32], index: 2, kind: input, shape index: {}]
  %s3 = inlined_call_operand.vmem [shape: f32[1,32], index: 3, kind: input, shape index: {}]
  %s4 = inlined_call_operand.hbm [shape: f32[16,32], index: 4, kind: output, shape index: {}]
  %s5 = sld [smem:[#allocation0]]
  $region57: #{tpu_custom_call.1} parent=0
    _
  %s7 = ssub.s32 1, %s5
  %s8 = scalar_select 0, %s7, %s5
  $region1: #{tpu_custom_call.1} parent=0
    #allocation2 [shape = 'u8[8192]{0}', space=vmem, size = 0x2000, scoped, tag = 'input window, operand 0']
    #allocation3 [shape = 's32[2]{0}', space=sflag, size = 0x8, scoped, tag = 'scoped memory for tpu_custom_call.1']
    #allocation4 [shape = 's32[2]{0}', space=sflag, size = 0x8, scoped, tag = 'scoped memory for tpu_custom_call.1']
    #allocation5 [shape = 'u8[8192]{0}', space=vmem, size = 0x2000, scoped, tag = 'input window, operand 1']
    #allocation6 [shape = 's32[2]{0}', space=sflag, size = 0x8, scoped, tag = 'scoped memory for tpu_custom_call.1']
    #allocation7 [shape = 'u8[8192]{0}', space=vmem, size = 0x2000, scoped, tag = 'output window, operand 0']
    %9 = vsyncpa [#allocation3], 0
    %s10 = scalar_lea.sflag [#allocation3], 1
    %11 = vsyncpa %s10, 0
    %12 = vsyncpa [#allocation6], 0
    %s13 = scalar_lea.sflag [#allocation6], 1
    %14 = vsyncpa %s13, 0
    %15 = vsyncpa [#allocation4], 0
    %s16 = scalar_lea.sflag [#allocation4], 1
    %17 = vsyncpa %s16, 0
    loop: start=0, step=1, limit=4
    $region2: #{tpu_custom_call.1} parent=1 // loop_pre_header
      _
    $region3: #{tpu_custom_call.1} parent=1 // loop_header
      %s19 = sphi 0, %s23
      %p20 = scmp.ge.s32.totalorder %s19, 4
      %s29 = sphi 0, %s31
      %s32 = sphi 0, %s29
      %s33 = sphi 0, %s32
      %s49 = sphi 0, %s33
      %s55 = sphi 0, %s57
      %s58 = sphi 0, %s55
      %s59 = sphi 0, %s58
      %s75 = sphi 0, %s59
      %s79 = sphi 0, %s79
      %s81 = sphi 0, %s79
      %s82 = sphi 0, %s81
      %s96 = sphi 0, %s82
      %s100 = sphi 0, %s100
      %s102 = sphi 0, %s100
      %s103 = sphi 0, %s102
      %s117 = sphi 0, %s103
      %s123 = sphi 0, %s125
      %s126 = sphi 0, %s123
      %s127 = sphi 0, %s126
      %s143 = sphi 0, %s127
    $region4: #{tpu_custom_call.1} parent=1 // loop_header_branch
      %22 = sbr.rel (%p20) target = $region8
    $region5: #{tpu_custom_call.1} parent=1 // loop_body
      %s24 = ssub.s32 %s19, 1
      %s25 = ssub.s32 %s19, 2
      %s26 = sadd.s32 %s19, 1
      %s27 = ssub.s32 %s19, %s26
      %p28 = scmp.eq.s32.totalorder %s27, 0
      %s30 = sadd.s32 %s29, 1
      %s31 = scalar_select %p28, %s29, %s30
      %p34 = pneg %p28
      %p35 = scmp.eq.s32.totalorder %s19, 1
      %p36 = por %p34, %p35
      %p37 = scmp.ne.s32.totalorder %s29, %s32
      %p38 = scmp.eq.s32.totalorder %s19, 0
      %p39 = por %p37, %p38
      %p40 = scmp.ne.s32.totalorder %s29, %s32
      %p41 = scmp.eq.s32.totalorder %s24, 1
      %p42 = por %p40, %p41
      %p43 = scmp.ne.s32.totalorder %s32, %s33
      %p44 = scmp.eq.s32.totalorder %s24, 0
      %p45 = por %p43, %p44
      %p46 = scmp.ne.s32.totalorder %s32, %s33
      %p47 = scmp.eq.s32.totalorder %s25, 1
      %p48 = por %p46, %p47
      %p50 = scmp.ne.s32.totalorder %s33, %s49
      %p51 = scmp.eq.s32.totalorder %s25, 0
      %p52 = por %p50, %p51
      %s53 = ssub.s32 %s19, %s26
      %p54 = scmp.eq.s32.totalorder %s53, 0
      %s56 = sadd.s32 %s55, 1
      %s57 = scalar_select %p54, %s55, %s56
      %p60 = pneg %p54
      %p61 = scmp.eq.s32.totalorder %s19, 1
      %p62 = por %p60, %p61
      %p63 = scmp.ne.s32.totalorder %s55, %s58
      %p64 = scmp.eq.s32.totalorder %s19, 0
      %p65 = por %p63, %p64
      %p66 = scmp.ne.s32.totalorder %s55, %s58
      %p67 = scmp.eq.s32.totalorder %s24, 1
      %p68 = por %p66, %p67
      %p69 = scmp.ne.s32.totalorder %s58, %s59
      %p70 = scmp.eq.s32.totalorder %s24, 0
      %p71 = por %p69, %p70
      %p72 = scmp.ne.s32.totalorder %s58, %s59
      %p73 = scmp.eq.s32.totalorder %s25, 1
      %p74 = por %p72, %p73
      %p76 = scmp.ne.s32.totalorder %s59, %s75
      %p77 = scmp.eq.s32.totalorder %s25, 0
      %p78 = por %p76, %p77
      %s80 = sadd.s32 %s79, 1
      %p83 = scmp.eq.s32.totalorder %s19, 1
      %p84 = scmp.ne.s32.totalorder %s79, %s81
      %p85 = scmp.eq.s32.totalorder %s19, 0
      %p86 = por %p84, %p85
      %p87 = scmp.ne.s32.totalorder %s79, %s81
      %p88 = scmp.eq.s32.totalorder %s24, 1
      %p89 = por %p87, %p88
      %p90 = scmp.ne.s32.totalorder %s81, %s82
      %p91 = scmp.eq.s32.totalorder %s24, 0
      %p92 = por %p90, %p91
      %p93 = scmp.ne.s32.totalorder %s81, %s82
      %p94 = scmp.eq.s32.totalorder %s25, 1
      %p95 = por %p93, %p94
      %p97 = scmp.ne.s32.totalorder %s82, %s96
      %p98 = scmp.eq.s32.totalorder %s25, 0
      %p99 = por %p97, %p98
      %s101 = sadd.s32 %s100, 1
      %p104 = scmp.eq.s32.totalorder %s19, 1
      %p105 = scmp.ne.s32.totalorder %s100, %s102
      %p106 = scmp.eq.s32.totalorder %s19, 0
      %p107 = por %p105, %p106
      %p108 = scmp.ne.s32.totalorder %s100, %s102
      %p109 = scmp.eq.s32.totalorder %s24, 1
      %p110 = por %p108, %p109
      %p111 = scmp.ne.s32.totalorder %s102, %s103
      %p112 = scmp.eq.s32.totalorder %s24, 0
      %p113 = por %p111, %p112
      %p114 = scmp.ne.s32.totalorder %s102, %s103
      %p115 = scmp.eq.s32.totalorder %s25, 1
      %p116 = por %p114, %p115
      %p118 = scmp.ne.s32.totalorder %s103, %s117
      %p119 = scmp.eq.s32.totalorder %s25, 0
      %p120 = por %p118, %p119
      %s121 = ssub.s32 %s19, %s26
      %p122 = scmp.eq.s32.totalorder %s121, 0
      %s124 = sadd.s32 %s123, 1
      %s125 = scalar_select %p122, %s123, %s124
      %p128 = pneg %p122
      %p129 = scmp.eq.s32.totalorder %s19, 1
      %p130 = por %p128, %p129
      %p131 = scmp.ne.s32.totalorder %s123, %s126
      %p132 = scmp.eq.s32.totalorder %s19, 0
      %p133 = por %p131, %p132
      %p134 = scmp.ne.s32.totalorder %s123, %s126
      %p135 = scmp.eq.s32.totalorder %s24, 1
      %p136 = por %p134, %p135
      %p137 = scmp.ne.s32.totalorder %s126, %s127
      %p138 = scmp.eq.s32.totalorder %s24, 0
      %p139 = por %p137, %p138
      %p140 = scmp.ne.s32.totalorder %s126, %s127
      %p141 = scmp.eq.s32.totalorder %s25, 1
      %p142 = por %p140, %p141
      %p144 = scmp.ne.s32.totalorder %s127, %s143
      %p145 = scmp.eq.s32.totalorder %s25, 0
      %p146 = por %p144, %p145
      %p147 = scmp.le.s32.totalorder 1, %s19
      %p148 = scmp.lt.s32.totalorder %s19, 3
      %p149 = pnand %p147, %p148
      %p150 = pneg %p149
      // Predicated region
      $region9: #{tpu_custom_call.1} parent=5 // pred_check
        _
      $region10: #{tpu_custom_call.1} parent=5 // pred_check_branch
        %152 = sbr.rel (%p149) target = $region12
      $region11: #{tpu_custom_call.1} parent=5 // pred_region
        %s153 = ssub.s32 %s19, 1
        // Predicated region
        $region13: #{tpu_custom_call.1} parent=11 // pred_check
          %p154 = pneg %p92
        $region14: #{tpu_custom_call.1} parent=11 // pred_check_branch
          %156 = sbr.rel (%p154) target = $region16
        $region15: #{tpu_custom_call.1} parent=11 // pred_region
          _
        $region16: #{tpu_custom_call.1} parent=11 // pred_fallthru
          _
        // Predicated region
        $region17: #{tpu_custom_call.1} parent=11 // pred_check
          %p157 = pneg %p113
        $region18: #{tpu_custom_call.1} parent=11 // pred_check_branch
          %159 = sbr.rel (%p157) target = $region20
        $region19: #{tpu_custom_call.1} parent=11 // pred_region
          _
        $region20: #{tpu_custom_call.1} parent=11 // pred_fallthru
          _
      $region12: #{tpu_custom_call.1} parent=5 // pred_fallthru
        _
      %p160 = scmp.lt.s32.totalorder %s19, 2
      // Predicated region
      $region21: #{tpu_custom_call.1} parent=5 // pred_check
        %p161 = pneg %p160
      $region22: #{tpu_custom_call.1} parent=5 // pred_check_branch
        %163 = sbr.rel (%p161) target = $region24
      $region23: #{tpu_custom_call.1} parent=5 // pred_region
        // Predicated region
        $region25: #{tpu_custom_call.1} parent=23 // pred_check
          %p164 = pneg %p39
        $region26: #{tpu_custom_call.1} parent=23 // pred_check_branch
          %166 = sbr.rel (%p164) target = $region28
        $region27: #{tpu_custom_call.1} parent=23 // pred_region
          %s167 = sand.u32 %s29, 1
          %s168 = scalar_lea.sflag [#allocation3], %s167
          %s169 = sand.u32 %s29, 1
          %s170 = smul.addr %s169, 8
          %s171 = scalar_lea.vmem [#allocation2], %s170
          %173 = vsyncadd %s168, 0
          %s174 = smul.addr %s19, 8
          %s175 = scalar_lea.hbm %s0, %s174
          %s177 = sshll.u32 %s175, 4
          %s178 = int_to_ptr.hbm [resolvable:$true] %s177
          %s179 = sshll.u32 %s171, 4
          %s180 = int_to_ptr.vmem [resolvable:$true] %s179
          %182 = dma.hbm_to_vmem [thread:$0]  %s178, 128, %s180, %s168
        $region28: #{tpu_custom_call.1} parent=23 // pred_fallthru
          _
        // Predicated region
        $region29: #{tpu_custom_call.1} parent=23 // pred_check
          %p183 = pneg %p65
        $region30: #{tpu_custom_call.1} parent=23 // pred_check_branch
          %185 = sbr.rel (%p183) target = $region32
        $region31: #{tpu_custom_call.1} parent=23 // pred_region
          %s186 = sand.u32 %s55, 1
          %s187 = scalar_lea.sflag [#allocation6], %s186
          %s188 = sand.u32 %s55, 1
          %s189 = smul.addr %s188, 8
          %s190 = scalar_lea.vmem [#allocation5], %s189
          %192 = vsyncadd %s187, 0
          %s193 = smul.addr %s19, 8
          %s194 = scalar_lea.hbm %s1, %s193
          %s196 = sshll.u32 %s194, 4
          %s197 = int_to_ptr.hbm [resolvable:$true] %s196
          %s198 = sshll.u32 %s190, 4
          %s199 = int_to_ptr.vmem [resolvable:$true] %s198
          %201 = dma.hbm_to_vmem [thread:$0]  %s197, 128, %s199, %s187
        $region32: #{tpu_custom_call.1} parent=23 // pred_fallthru
          _
      $region24: #{tpu_custom_call.1} parent=5 // pred_fallthru
        _
      %p202 = scmp.le.s32.totalorder 1, %s19
      %p203 = scmp.lt.s32.totalorder %s19, 3
      %p204 = pnand %p202, %p203
      %p205 = pneg %p204
      // Predicated region
      $region33: #{tpu_custom_call.1} parent=5 // pred_check
        _
      $region34: #{tpu_custom_call.1} parent=5 // pred_check_branch
        %207 = sbr.rel (%p204) target = $region36
      $region35: #{tpu_custom_call.1} parent=5 // pred_region
        %s208 = ssub.s32 %s19, 1
        %s209 = sand.u32 %s32, 1
        %s210 = scalar_lea.sflag [#allocation3], %s209
        %s211 = sand.u32 %s32, 1
        %s212 = smul.addr %s211, 8
        %s213 = scalar_lea.vmem [#allocation2], %s212
        // Predicated region
        $region37: #{tpu_custom_call.1} parent=35 // pred_check
          %p214 = pneg %p45
        $region38: #{tpu_custom_call.1} parent=35 // pred_check_branch
          %216 = sbr.rel (%p214) target = $region40
        $region39: #{tpu_custom_call.1} parent=35 // pred_region
          %218 = dma.done %s210, 128
        $region40: #{tpu_custom_call.1} parent=35 // pred_fallthru
          _
        %s219 = sand.u32 %s58, 1
        %s220 = scalar_lea.sflag [#allocation6], %s219
        %s221 = sand.u32 %s58, 1
        %s222 = smul.addr %s221, 8
        %s223 = scalar_lea.vmem [#allocation5], %s222
        // Predicated region
        $region41: #{tpu_custom_call.1} parent=35 // pred_check
          %p224 = pneg %p71
        $region42: #{tpu_custom_call.1} parent=35 // pred_check_branch
          %226 = sbr.rel (%p224) target = $region44
        $region43: #{tpu_custom_call.1} parent=35 // pred_region
          %228 = dma.done %s220, 128
        $region44: #{tpu_custom_call.1} parent=35 // pred_fallthru
          _
        %s229 = sand.u32 %s32, 1
        %s230 = scalar_lea.sflag [#allocation3], %s229
        %s231 = sand.u32 %s32, 1
        %s232 = smul.addr %s231, 8
        %s233 = scalar_lea.vmem [#allocation2], %s232
        %p234 = pneg %p45
        %p235 = pneg %p42
        %s236 = sand.u32 %s58, 1
        %s237 = scalar_lea.sflag [#allocation6], %s236
        %s238 = sand.u32 %s58, 1
        %s239 = smul.addr %s238, 8
        %s240 = scalar_lea.vmem [#allocation5], %s239
        %p241 = pneg %p71
        %p242 = pneg %p68
        %p243 = pneg %p92
        %p244 = pneg %p89
        %p245 = pneg %p113
        %p246 = pneg %p110
        %p247 = pneg %p139
        %p248 = pneg %p136
        %s249 = sand.u32 %s126, 1
        %s250 = scalar_lea.sflag [#allocation4], %s249
        %s251 = sand.u32 %s126, 1
        %s252 = smul.addr %s251, 8
        %s253 = scalar_lea.vmem [#allocation7], %s252
        %v254 = vld [vmem:[%s213] sm:$0xff]
        %v255 = vld [vmem:[%s223] sm:$0xff]
        %v256 = vadd.f32 %v254, %v255
        %vm257 = vcmask 261120
        %v258 = vsel %vm257, %v256, 0.0
        %259 = vadd.xlane.f32.xlu0 %v258
        %v260 = vpop.xlane.xlu0 %259
        %v261 = vrcp.pop 32.0
        %v262 = vmul.f32 32.0, %v261
        %v263 = vsub.f32 1.0, %v262
        %v264 = vmul.f32 %v261, %v263
        %v265 = vadd.f32 %v261, %v264
        %vm266 = vweird.f32 %v261
        %v267 = vsel %vm266, %v261, %v265
        %v268 = vmul.f32 %v260, %v267
        %v269 = vsub.f32 %v256, %v268
        %v270 = vmul.f32 %v269, %v269
        %v271 = vsel %vm257, %v270, 0.0
        %272 = vadd.xlane.f32.xlu0 %v271
        %v273 = vpop.xlane.xlu0 %272
        %v274 = vmul.f32 %v273, %v267
        %v275 = vadd.f32 %v274, 1e-05
        %v276 = vrsqrt.pop %v275
        %v277 = vmul.f32 %v276, %v275
        %v278 = vmul.f32 %v277, %v276
        %v279 = vmul.f32 0.5, %v278
        %v280 = vsub.f32 1.5, %v279
        %v281 = vmul.f32 %v276, %v280
        %vm282 = vweird.f32 %v275
        %vm283 = vweird.f32 %v276
        %vm284 = vmor %vm282, %vm283
        %v285 = vsel %vm284, %v276, %v281
        %v286 = vmul.f32 %v269, %v285
        %v287 = vld [vmem:[%s2] sm:$0x1]
        %v289 = vperm.slane %v287, 0
        %v291 = vmul.f32 %v286, %v289
        %v292 = vld [vmem:[%s3] sm:$0x1]
        %v294 = vperm.slane %v292, 0
        %v296 = vadd.f32 %v291, %v294
        %297 = vst.msk [vmem:[%s253] sm:$0xff] %vm257, %v296
        %s298 = sand.u32 %s126, 1
        %s299 = scalar_lea.sflag [#allocation4], %s298
        %s300 = sand.u32 %s126, 1
        %s301 = smul.addr %s300, 8
        %s302 = scalar_lea.vmem [#allocation7], %s301
        // Predicated region
        $region45: #{tpu_custom_call.1} parent=35 // pred_check
          %p303 = pneg %p136
        $region46: #{tpu_custom_call.1} parent=35 // pred_check_branch
          %305 = sbr.rel (%p303) target = $region48
        $region47: #{tpu_custom_call.1} parent=35 // pred_region
          %307 = vsyncadd %s299, 0
          %s308 = smul.addr %s24, 8
          %s309 = scalar_lea.hbm %s4, %s308
          %s311 = sshll.u32 %s302, 4
          %s312 = int_to_ptr.vmem [resolvable:$true] %s311
          %s313 = sshll.u32 %s309, 4
          %s314 = int_to_ptr.hbm [resolvable:$true] %s313
          %316 = dma.vmem_to_hbm [thread:$0]  %s312, 128, %s314, %s299
        $region48: #{tpu_custom_call.1} parent=35 // pred_fallthru
          _
      $region36: #{tpu_custom_call.1} parent=5 // pred_fallthru
        _
      %p317 = scmp.le.s32.totalorder 2, %s19
      // Predicated region
      $region49: #{tpu_custom_call.1} parent=5 // pred_check
        %p318 = pneg %p317
      $region50: #{tpu_custom_call.1} parent=5 // pred_check_branch
        %320 = sbr.rel (%p318) target = $region52
      $region51: #{tpu_custom_call.1} parent=5 // pred_region
        %s321 = ssub.s32 %s19, 2
        // Predicated region
        $region53: #{tpu_custom_call.1} parent=51 // pred_check
          %p322 = pneg %p142
        $region54: #{tpu_custom_call.1} parent=51 // pred_check_branch
          %324 = sbr.rel (%p322) target = $region56
        $region55: #{tpu_custom_call.1} parent=51 // pred_region
          %s325 = sand.u32 %s127, 1
          %s326 = scalar_lea.sflag [#allocation4], %s325
          %s327 = sand.u32 %s127, 1
          %s328 = smul.addr %s327, 8
          %s329 = scalar_lea.vmem [#allocation7], %s328
          %331 = dma.done %s326, 128
        $region56: #{tpu_custom_call.1} parent=51 // pred_fallthru
          _
      $region52: #{tpu_custom_call.1} parent=5 // pred_fallthru
        _
    $region6: #{tpu_custom_call.1} parent=1 // loop_footer
      %s23 = sadd.s32 1, %s19
    $region7: #{tpu_custom_call.1} parent=1 // loop_footer_branch
      %18 = sbr.rel target = $region3
    $region8: #{tpu_custom_call.1} parent=1 // loop_exit
      _
    %332 = vsyncpa [#allocation3], 1
    %s333 = scalar_lea.sflag [#allocation3], 1
    %334 = vsyncpa %s333, 1
    %335 = vsyncpa [#allocation6], 1
    %s336 = scalar_lea.sflag [#allocation6], 1
    %337 = vsyncpa %s336, 1
    %338 = vsyncpa [#allocation4], 1
    %s339 = scalar_lea.sflag [#allocation4], 1
    %340 = vsyncpa %s339, 1

</llo_original>
